<compile_context>
chip_gen: v7x
topology: tpu7x:2x2x1
jax: 0.10.0
libtpu: 0.0.40
codegen_flags: <defaults>
</compile_context>

<pallas_src>
import functools

import jax
import jax.numpy as jnp
from jax import lax
from jax.experimental import pallas as pl
from jax.experimental.pallas import tpu as pltpu

LANE = 128


def _round_up(x, m):
    return (x + m - 1) // m * m


def _choose_bt(batch, seq, target_rows=256):
    """Largest divisor of `batch` with Bt <= ceil(target_rows/seq) (fills MXU rows)."""
    want = max(1, -(-target_rows // seq))
    bt = 1
    for d in range(1, batch + 1):
        if batch % d == 0 and d <= want:
            bt = d
    return bt


def _const_spec(shape):
    zeros = (0,) * len(shape)
    return pl.BlockSpec(tuple(shape), lambda b, _z=zeros: _z)


# ----------------------------------------------------------------------------
# Fused kernel: all conv layers + global time-max + final Linear, Bt batch
# elements co-batched into the matmul M dimension per grid step.
# ----------------------------------------------------------------------------
def _encoder_kernel(x_ref, *refs, T, Bt, K, C0, PAD, meta):
    """refs = [w_0, b_0, ..., w_{L-1}, b_{L-1}, w_fc, b_fc, o_ref, buf]

    x_ref : (Bt, T, C0) f32 input block (NLC)
    w_i   : (K, cin_i, cout_i) bf16     b_i : (1, cout_i) f32
    w_fc  : (c_last, CODEP) bf16        b_fc: (1, CODEP) f32
    o_ref : (1, Bt, CODEP) f32
    buf   : (PAD + Bt*T, CB) bf16 activation scratch; element e, time t lives at
            row PAD + e*T + t.  Rows [0, PAD) are never written; shifted tap
            reads that land there (or on a neighbouring element) are masked.
    meta  : static tuple of (dilation, cin, cout) per conv layer
    """
    L = len(meta)
    w_refs = refs[0:2 * L:2]
    b_refs = refs[1:2 * L:2]
    wfc_ref = refs[2 * L]
    bfc_ref = refs[2 * L + 1]
    o_ref = refs[2 * L + 2]
    buf = refs[2 * L + 3]
    BtT = Bt * T

    # Stage the input rows (bf16) into the shared activation buffer.
    for e in range(Bt):
        buf[PAD + e * T:PAD + (e + 1) * T, 0:C0] = x_ref[e].astype(jnp.bfloat16)

    # Static "time within element" index per row, used for causal masking.
    tcol = lax.broadcasted_iota(jnp.int32, (T, 1), 0)
    tvec = jnp.concatenate([tcol] * Bt, axis=0) if Bt > 1 else tcol      # (BtT, 1)

    h = None
    for li, (d, cin, cout) in enumerate(meta):
        tb = jnp.broadcast_to(tvec, (BtT, cin))                 # hoisted per layer
        # Tap K-1 has zero shift: read the stored activations directly.
        acc = jnp.dot(buf[PAD:PAD + BtT, 0:cin], w_refs[li][K - 1],
                      preferred_element_type=jnp.float32)       # (BtT, cout) f32
        for k in range(K - 1):
            s = (K - 1 - k) * d                                 # static shift > 0
            slab = buf[PAD - s:PAD - s + BtT, 0:cin]            # (BtT, cin) bf16
            # Mask causally-invalid rows (t < s): covers both the never-written
            # halo region and rows leaking from the previous co-batched element.
            slab = jnp.where(tb < s, jnp.zeros_like(slab), slab)
            acc = acc + jnp.dot(slab, w_refs[li][k],
                                preferred_element_type=jnp.float32)
        h = jnp.maximum(acc + b_refs[li][...], 0.0)             # bias + ReLU (f32)
        if li + 1 < L:
            buf[PAD:PAD + BtT, 0:cout] = h.astype(jnp.bfloat16)

    # Head: per-element global max over time, then the lane-padded final Linear.
    maxes = [jnp.max(h[e * T:(e + 1) * T, :], axis=0, keepdims=True)
             for e in range(Bt)]
    hmax = jnp.concatenate(maxes, axis=0) if Bt > 1 else maxes[0]        # (Bt, c_last)
    out = jnp.dot(hmax.astype(jnp.bfloat16), wfc_ref[...],
                  preferred_element_type=jnp.float32) + bfc_ref[...]
    o_ref[0] = out


# ----------------------------------------------------------------------------
# One-time parameter packing (hoisted out of the forward path).
# ----------------------------------------------------------------------------
def pack_params(conv_params, w_fc, b_fc, emb_size):
    K = conv_params[0][0].shape[0]
    layers, meta = [], []
    cin = emb_size
    for (w_kio, bias, dilation) in conv_params:
        Kw, cin_w, cout = w_kio.shape
        assert Kw == K and cin_w == cin
        layers.append((jnp.asarray(w_kio, jnp.bfloat16),                 # (K, cin, cout)
                       jnp.asarray(bias, jnp.float32).reshape(1, cout)))
        meta.append((int(dilation), int(cin), int(cout)))
        cin = cout
    code = w_fc.shape[1]
    codep = _round_up(code, LANE)
    wfc = (jnp.zeros((cin, codep), jnp.float32)
           .at[:, :code].set(w_fc).astype(jnp.bfloat16))
    bfc = jnp.zeros((1, codep), jnp.float32).at[:, :code].set(b_fc.reshape(1, code))
    return dict(K=int(K), meta=tuple(meta), layers=layers,
                wfc=wfc, bfc=bfc, code=int(code), codep=int(codep))


# ----------------------------------------------------------------------------
# Forward wrapper: bare pallas_call (plus the NCL->NLC layout fix-up).
# ----------------------------------------------------------------------------
def conv_encoder_forward(x_ncl, packed, *, bt=None):
    """x_ncl: (B, emb_size, seq) float32, PyTorch NCL convention."""
    B, C0, T = x_ncl.shape
    K = packed["K"]
    meta = packed["meta"]
    CODEP = packed["codep"]
    assert C0 == meta[0][1]

    Bt = bt if bt is not None else _choose_bt(B, T)
    assert B % Bt == 0
    BtT = Bt * T
    nsteps = B // Bt

    max_halo = max((K - 1) * d for (d, _, _) in meta)
    PAD = max(_round_up(max_halo, 16), 16)                   # bf16 sublane-tile aligned
    CB = _round_up(max([C0] + [c for (_, _, c) in meta]), LANE)

    x_nlc = jnp.transpose(x_ncl, (0, 2, 1))                  # NCL -> NLC

    kernel = functools.partial(_encoder_kernel, T=T, Bt=Bt, K=K, C0=C0,
                               PAD=PAD, meta=meta)

    flat = [x_nlc]
    in_specs = [pl.BlockSpec((Bt, T, C0), lambda b: (b, 0, 0))]
    for (w_b, b_p) in packed["layers"]:
        flat += [w_b, b_p]
        in_specs += [_const_spec(w_b.shape), _const_spec(b_p.shape)]
    flat += [packed["wfc"], packed["bfc"]]
    in_specs += [_const_spec(packed["wfc"].shape), _const_spec(packed["bfc"].shape)]

    # VMEM budget from actual sizes (double-buffered operands + bf16 scratch).
    w_bytes = sum(int(a.size) * a.dtype.itemsize for a in flat[1:])
    blk_bytes = Bt * T * C0 * 4 + Bt * CODEP * 4
    scratch_bytes = (PAD + BtT) * CB * 2
    need = 2 * (w_bytes + blk_bytes) + scratch_bytes
    vmem_limit = int(min(max(32 * 1024 * 1024, 2 * need), 96 * 1024 * 1024))

    out = pl.pallas_call(
        kernel,
        out_shape=jax.ShapeDtypeStruct((nsteps, Bt, CODEP), jnp.float32),
        grid=(nsteps,),
        in_specs=in_specs,
        out_specs=pl.BlockSpec((1, Bt, CODEP), lambda b: (b, 0, 0)),
        scratch_shapes=[pltpu.VMEM((PAD + BtT, CB), jnp.bfloat16)],
        compiler_params=pltpu.CompilerParams(
            dimension_semantics=("parallel",),
            vmem_limit_bytes=vmem_limit),
    )(*flat)
    return out.reshape(B, CODEP)[:, :packed["code"]]


# ----------------------------------------------------------------------------
# Pure-JAX reference (f32)
# ----------------------------------------------------------------------------
def conv_encoder_reference(x_ncl, conv_params, w_fc, b_fc):
    h = x_ncl
    for (w_kio, bias, dilation) in conv_params:
        K = w_kio.shape[0]
        w_oik = jnp.transpose(w_kio, (2, 1, 0))              # torch (Cout, Cin, K)
        pad = (K - 1) * dilation
        h = lax.conv_general_dilated(
            h, w_oik, window_strides=(1,), padding=[(pad, 0)],
            rhs_dilation=(dilation,),
            dimension_numbers=("NCH", "OIH", "NCH"))
        h = jnp.maximum(h + bias[None, :, None], 0.0)
    H = jnp.max(h, axis=-1)                                  # (B, C_last)
    return H @ w_fc + b_fc[None, :]


# ----------------------------------------------------------------------------
# Main
# ----------------------------------------------------------------------------
if __name__ == "__main__":
    batch = 2
    emb_size = 8
    seq = 16
    channels = [16, 32]          # DCConvStack channels (emb_size prepended)
    code_size = 8
    kernel_size = 4              # small K for the test; kernel handles any K

    chan_list = [emb_size] + channels
    key = jax.random.PRNGKey(0)

    conv_params = []
    for i in range(len(chan_list) - 1):
        cin, cout = chan_list[i], chan_list[i + 1]
        key, kw, kb = jax.random.split(key, 3)
        w = jax.random.normal(kw, (kernel_size, cin, cout), jnp.float32) * 0.1
        b = jax.random.normal(kb, (cout,), jnp.float32) * 0.1
        conv_params.append((w, b, 2 ** i))                   # dilation = 2**i

    key, kw, kb, kx = jax.random.split(key, 4)
    w_fc = jax.random.normal(kw, (chan_list[-1], code_size), jnp.float32) * 0.1
    b_fc = jax.random.normal(kb, (code_size,), jnp.float32) * 0.1

    x = jax.random.normal(kx, (batch, emb_size, seq), jnp.float32)   # NCL

    packed = pack_params(conv_params, w_fc, b_fc, emb_size)  # one-time packing
    out = jax.block_until_ready(conv_encoder_forward(x, packed))
    ref = jax.block_until_ready(conv_encoder_reference(x, conv_params, w_fc, b_fc))

    assert out.shape == (batch, code_size)
    # bf16 MXU inputs with f32 accumulation -> ~1e-2-level agreement vs f32 ref.
    assert jnp.allclose(out, ref, atol=2e-2, rtol=2e-2), (out, ref)

    print("KERNEL_OK")
</pallas_src>

<mosaic_0001>
module attributes {stable_mosaic.version = 11 : i64} {
  func.func @_encoder_kernel(%arg0: i32, %arg1: memref<2x16x8xf32, #tpu.memory_space<vmem>>, %arg2: memref<4x8x16xbf16, #tpu.memory_space<vmem>>, %arg3: memref<1x16xf32, #tpu.memory_space<vmem>>, %arg4: memref<4x16x32xbf16, #tpu.memory_space<vmem>>, %arg5: memref<1x32xf32, #tpu.memory_space<vmem>>, %arg6: memref<32x128xbf16, #tpu.memory_space<vmem>>, %arg7: memref<1x128xf32, #tpu.memory_space<vmem>>, %arg8: memref<1x2x128xf32, #tpu.memory_space<vmem>>, %arg9: memref<48x128xbf16, #tpu.memory_space<vmem>>) attributes {dimension_semantics = [#tpu.dimension_semantics<parallel>], iteration_bounds = array<i64: 1>, scalar_prefetch = 0 : i64, scratch_operands = 1 : i64, tpu.core_type = #tpu.core_type<tc>, window_params = [{transform_indices = @transform_0, window_bounds = array<i64: 2, 16, 8>}, {pipeline_mode = #tpu.pipeline_mode<synchronous>, transform_indices = @transform_1, window_bounds = array<i64: 4, 8, 16>}, {pipeline_mode = #tpu.pipeline_mode<synchronous>, transform_indices = @transform_2, window_bounds = array<i64: 1, 16>}, {pipeline_mode = #tpu.pipeline_mode<synchronous>, transform_indices = @transform_3, window_bounds = array<i64: 4, 16, 32>}, {pipeline_mode = #tpu.pipeline_mode<synchronous>, transform_indices = @transform_4, window_bounds = array<i64: 1, 32>}, {pipeline_mode = #tpu.pipeline_mode<synchronous>, transform_indices = @transform_5, window_bounds = array<i64: 32, 128>}, {pipeline_mode = #tpu.pipeline_mode<synchronous>, transform_indices = @transform_6, window_bounds = array<i64: 1, 128>}, {transform_indices = @transform_7, window_bounds = array<i64: 1, 2, 128>}]} {
    %c0 = arith.constant 0 : index
    %c0_0 = arith.constant 0 : index
    %c0_1 = arith.constant 0 : index
    %0 = vector.load %arg1[%c0, %c0_0, %c0_1] : memref<2x16x8xf32, #tpu.memory_space<vmem>>, vector<1x16x8xf32>
    %1 = vector.shape_cast %0 : vector<1x16x8xf32> to vector<16x8xf32>
    %2 = arith.truncf %1 : vector<16x8xf32> to vector<16x8xbf16>
    %c16 = arith.constant 16 : index
    %c0_2 = arith.constant 0 : index
    %3 = vector.load %arg9[%c16, %c0_2] : memref<48x128xbf16, #tpu.memory_space<vmem>>, vector<16x8xbf16>
    tpu.vector_store %arg9[%c16, %c0_2], %2 {strides = array<i32>} : memref<48x128xbf16, #tpu.memory_space<vmem>>, vector<16x8xbf16>,
    %c1 = arith.constant 1 : index
    %c0_3 = arith.constant 0 : index
    %c0_4 = arith.constant 0 : index
    %4 = vector.load %arg1[%c1, %c0_3, %c0_4] : memref<2x16x8xf32, #tpu.memory_space<vmem>>, vector<1x16x8xf32>
    %5 = vector.shape_cast %4 : vector<1x16x8xf32> to vector<16x8xf32>
    %6 = arith.truncf %5 : vector<16x8xf32> to vector<16x8xbf16>
    %c32 = arith.constant 32 : index
    %c0_5 = arith.constant 0 : index
    %7 = vector.load %arg9[%c32, %c0_5] : memref<48x128xbf16, #tpu.memory_space<vmem>>, vector<16x8xbf16>
    tpu.vector_store %arg9[%c32, %c0_5], %6 {strides = array<i32>} : memref<48x128xbf16, #tpu.memory_space<vmem>>, vector<16x8xbf16>,
    %8 = tpu.iota {dimensions = array<i32: 0>} : vector<16x1xi32>
    %9 = tpu.concatenate %8, %8 in 0 : vector<16x1xi32>, vector<16x1xi32> -> vector<32x1xi32>
    %10 = vector.shape_cast %9 : vector<32x1xi32> to vector<32x1xi32>
    %11 = vector.broadcast %10 : vector<32x1xi32> to vector<32x8xi32>
    %c16_6 = arith.constant 16 : index
    %c0_7 = arith.constant 0 : index
    %12 = vector.load %arg9[%c16_6, %c0_7] : memref<48x128xbf16, #tpu.memory_space<vmem>>, vector<32x8xbf16>
    %c3 = arith.constant 3 : index
    %c0_8 = arith.constant 0 : index
    %c0_9 = arith.constant 0 : index
    %13 = vector.load %arg2[%c3, %c0_8, %c0_9] : memref<4x8x16xbf16, #tpu.memory_space<vmem>>, vector<1x8x16xbf16>
    %14 = vector.shape_cast %13 : vector<1x8x16xbf16> to vector<8x16xbf16>
    %cst = arith.constant dense<0.000000e+00> : vector<32x16xf32>
    %15 = tpu.matmul %12, %14, %cst {dimension_numbers = #tpu.dot_dimension_numbers<[1], [0], [0], [1], [0, 0, 1, 1], [], []>} : vector<32x8xbf16>, vector<8x16xbf16>, vector<32x16xf32> -> vector<32x16xf32>
    %c13 = arith.constant 13 : index
    %c0_10 = arith.constant 0 : index
    %16 = vector.load %arg9[%c13, %c0_10] : memref<48x128xbf16, #tpu.memory_space<vmem>>, vector<32x8xbf16>
    %c3_i32 = arith.constant 3 : i32
    %17 = vector.broadcast %c3_i32 : i32 to vector<32x8xi32>
    %18 = arith.cmpi slt, %11, %17 : vector<32x8xi32>
    %cst_11 = arith.constant 0.000000e+00 : bf16
    %19 = vector.broadcast %cst_11 : bf16 to vector<32x8xbf16>
    %20 = arith.select %18, %19, %16 : vector<32x8xi1>, vector<32x8xbf16>
    %c0_12 = arith.constant 0 : index
    %c0_13 = arith.constant 0 : index
    %c0_14 = arith.constant 0 : index
    %21 = vector.load %arg2[%c0_12, %c0_13, %c0_14] : memref<4x8x16xbf16, #tpu.memory_space<vmem>>, vector<1x8x16xbf16>
    %22 = vector.shape_cast %21 : vector<1x8x16xbf16> to vector<8x16xbf16>
    %cst_15 = arith.constant dense<0.000000e+00> : vector<32x16xf32>
    %23 = tpu.matmul %20, %22, %cst_15 {dimension_numbers = #tpu.dot_dimension_numbers<[1], [0], [0], [1], [0, 0, 1, 1], [], []>} : vector<32x8xbf16>, vector<8x16xbf16>, vector<32x16xf32> -> vector<32x16xf32>
    %24 = arith.addf %15, %23 : vector<32x16xf32>
    %c14 = arith.constant 14 : index
    %c0_16 = arith.constant 0 : index
    %25 = vector.load %arg9[%c14, %c0_16] : memref<48x128xbf16, #tpu.memory_space<vmem>>, vector<32x8xbf16>
    %c2_i32 = arith.constant 2 : i32
    %26 = vector.broadcast %c2_i32 : i32 to vector<32x8xi32>
    %27 = arith.cmpi slt, %11, %26 : vector<32x8xi32>
    %cst_17 = arith.constant 0.000000e+00 : bf16
    %28 = vector.broadcast %cst_17 : bf16 to vector<32x8xbf16>
    %29 = arith.select %27, %28, %25 : vector<32x8xi1>, vector<32x8xbf16>
    %c1_18 = arith.constant 1 : index
    %c0_19 = arith.constant 0 : index
    %c0_20 = arith.constant 0 : index
    %30 = vector.load %arg2[%c1_18, %c0_19, %c0_20] : memref<4x8x16xbf16, #tpu.memory_space<vmem>>, vector<1x8x16xbf16>
    %31 = vector.shape_cast %30 : vector<1x8x16xbf16> to vector<8x16xbf16>
    %cst_21 = arith.constant dense<0.000000e+00> : vector<32x16xf32>
    %32 = tpu.matmul %29, %31, %cst_21 {dimension_numbers = #tpu.dot_dimension_numbers<[1], [0], [0], [1], [0, 0, 1, 1], [], []>} : vector<32x8xbf16>, vector<8x16xbf16>, vector<32x16xf32> -> vector<32x16xf32>
    %33 = arith.addf %24, %32 : vector<32x16xf32>
    %c15 = arith.constant 15 : index
    %c0_22 = arith.constant 0 : index
    %34 = vector.load %arg9[%c15, %c0_22] : memref<48x128xbf16, #tpu.memory_space<vmem>>, vector<32x8xbf16>
    %c1_i32 = arith.constant 1 : i32
    %35 = vector.broadcast %c1_i32 : i32 to vector<32x8xi32>
    %36 = arith.cmpi slt, %11, %35 : vector<32x8xi32>
    %cst_23 = arith.constant 0.000000e+00 : bf16
    %37 = vector.broadcast %cst_23 : bf16 to vector<32x8xbf16>
    %38 = arith.select %36, %37, %34 : vector<32x8xi1>, vector<32x8xbf16>
    %c2 = arith.constant 2 : index
    %c0_24 = arith.constant 0 : index
    %c0_25 = arith.constant 0 : index
    %39 = vector.load %arg2[%c2, %c0_24, %c0_25] : memref<4x8x16xbf16, #tpu.memory_space<vmem>>, vector<1x8x16xbf16>
    %40 = vector.shape_cast %39 : vector<1x8x16xbf16> to vector<8x16xbf16>
    %cst_26 = arith.constant dense<0.000000e+00> : vector<32x16xf32>
    %41 = tpu.matmul %38, %40, %cst_26 {dimension_numbers = #tpu.dot_dimension_numbers<[1], [0], [0], [1], [0, 0, 1, 1], [], []>} : vector<32x8xbf16>, vector<8x16xbf16>, vector<32x16xf32> -> vector<32x16xf32>
    %42 = arith.addf %33, %41 : vector<32x16xf32>
    %c0_27 = arith.constant 0 : index
    %c0_28 = arith.constant 0 : index
    %43 = vector.load %arg3[%c0_27, %c0_28] : memref<1x16xf32, #tpu.memory_space<vmem>>, vector<1x16xf32>
    %44 = vector.broadcast %43 : vector<1x16xf32> to vector<32x16xf32>
    %45 = arith.addf %42, %44 : vector<32x16xf32>
    %cst_29 = arith.constant 0.000000e+00 : f32
    %46 = vector.broadcast %cst_29 : f32 to vector<32x16xf32>
    %47 = arith.maximumf %45, %46 : vector<32x16xf32>
    %48 = arith.truncf %47 : vector<32x16xf32> to vector<32x16xbf16>
    %c16_30 = arith.constant 16 : index
    %c0_31 = arith.constant 0 : index
    %49 = vector.load %arg9[%c16_30, %c0_31] : memref<48x128xbf16, #tpu.memory_space<vmem>>, vector<32x16xbf16>
    tpu.vector_store %arg9[%c16_30, %c0_31], %48 {strides = array<i32>} : memref<48x128xbf16, #tpu.memory_space<vmem>>, vector<32x16xbf16>,
    %50 = vector.shape_cast %9 : vector<32x1xi32> to vector<32x1xi32>
    %51 = vector.broadcast %50 : vector<32x1xi32> to vector<32x16xi32>
    %c16_32 = arith.constant 16 : index
    %c0_33 = arith.constant 0 : index
    %52 = vector.load %arg9[%c16_32, %c0_33] : memref<48x128xbf16, #tpu.memory_space<vmem>>, vector<32x16xbf16>
    %c3_34 = arith.constant 3 : index
    %c0_35 = arith.constant 0 : index
    %c0_36 = arith.constant 0 : index
    %53 = vector.load %arg4[%c3_34, %c0_35, %c0_36] : memref<4x16x32xbf16, #tpu.memory_space<vmem>>, vector<1x16x32xbf16>
    %54 = vector.shape_cast %53 : vector<1x16x32xbf16> to vector<16x32xbf16>
    %cst_37 = arith.constant dense<0.000000e+00> : vector<32x32xf32>
    %55 = tpu.matmul %52, %54, %cst_37 {dimension_numbers = #tpu.dot_dimension_numbers<[1], [0], [0], [1], [0, 0, 1, 1], [], []>} : vector<32x16xbf16>, vector<16x32xbf16>, vector<32x32xf32> -> vector<32x32xf32>
    %c10 = arith.constant 10 : index
    %c0_38 = arith.constant 0 : index
    %56 = vector.load %arg9[%c10, %c0_38] : memref<48x128xbf16, #tpu.memory_space<vmem>>, vector<32x16xbf16>
    %c6_i32 = arith.constant 6 : i32
    %57 = vector.broadcast %c6_i32 : i32 to vector<32x16xi32>
    %58 = arith.cmpi slt, %51, %57 : vector<32x16xi32>
    %cst_39 = arith.constant 0.000000e+00 : bf16
    %59 = vector.broadcast %cst_39 : bf16 to vector<32x16xbf16>
    %60 = arith.select %58, %59, %56 : vector<32x16xi1>, vector<32x16xbf16>
    %c0_40 = arith.constant 0 : index
    %c0_41 = arith.constant 0 : index
    %c0_42 = arith.constant 0 : index
    %61 = vector.load %arg4[%c0_40, %c0_41, %c0_42] : memref<4x16x32xbf16, #tpu.memory_space<vmem>>, vector<1x16x32xbf16>
    %62 = vector.shape_cast %61 : vector<1x16x32xbf16> to vector<16x32xbf16>
    %cst_43 = arith.constant dense<0.000000e+00> : vector<32x32xf32>
    %63 = tpu.matmul %60, %62, %cst_43 {dimension_numbers = #tpu.dot_dimension_numbers<[1], [0], [0], [1], [0, 0, 1, 1], [], []>} : vector<32x16xbf16>, vector<16x32xbf16>, vector<32x32xf32> -> vector<32x32xf32>
    %64 = arith.addf %55, %63 : vector<32x32xf32>
    %c12 = arith.constant 12 : index
    %c0_44 = arith.constant 0 : index
    %65 = vector.load %arg9[%c12, %c0_44] : memref<48x128xbf16, #tpu.memory_space<vmem>>, vector<32x16xbf16>
    %c4_i32 = arith.constant 4 : i32
    %66 = vector.broadcast %c4_i32 : i32 to vector<32x16xi32>
    %67 = arith.cmpi slt, %51, %66 : vector<32x16xi32>
    %cst_45 = arith.constant 0.000000e+00 : bf16
    %68 = vector.broadcast %cst_45 : bf16 to vector<32x16xbf16>
    %69 = arith.select %67, %68, %65 : vector<32x16xi1>, vector<32x16xbf16>
    %c1_46 = arith.constant 1 : index
    %c0_47 = arith.constant 0 : index
    %c0_48 = arith.constant 0 : index
    %70 = vector.load %arg4[%c1_46, %c0_47, %c0_48] : memref<4x16x32xbf16, #tpu.memory_space<vmem>>, vector<1x16x32xbf16>
    %71 = vector.shape_cast %70 : vector<1x16x32xbf16> to vector<16x32xbf16>
    %cst_49 = arith.constant dense<0.000000e+00> : vector<32x32xf32>
    %72 = tpu.matmul %69, %71, %cst_49 {dimension_numbers = #tpu.dot_dimension_numbers<[1], [0], [0], [1], [0, 0, 1, 1], [], []>} : vector<32x16xbf16>, vector<16x32xbf16>, vector<32x32xf32> -> vector<32x32xf32>
    %73 = arith.addf %64, %72 : vector<32x32xf32>
    %c14_50 = arith.constant 14 : index
    %c0_51 = arith.constant 0 : index
    %74 = vector.load %arg9[%c14_50, %c0_51] : memref<48x128xbf16, #tpu.memory_space<vmem>>, vector<32x16xbf16>
    %c2_i32_52 = arith.constant 2 : i32
    %75 = vector.broadcast %c2_i32_52 : i32 to vector<32x16xi32>
    %76 = arith.cmpi slt, %51, %75 : vector<32x16xi32>
    %cst_53 = arith.constant 0.000000e+00 : bf16
    %77 = vector.broadcast %cst_53 : bf16 to vector<32x16xbf16>
    %78 = arith.select %76, %77, %74 : vector<32x16xi1>, vector<32x16xbf16>
    %c2_54 = arith.constant 2 : index
    %c0_55 = arith.constant 0 : index
    %c0_56 = arith.constant 0 : index
    %79 = vector.load %arg4[%c2_54, %c0_55, %c0_56] : memref<4x16x32xbf16, #tpu.memory_space<vmem>>, vector<1x16x32xbf16>
    %80 = vector.shape_cast %79 : vector<1x16x32xbf16> to vector<16x32xbf16>
    %cst_57 = arith.constant dense<0.000000e+00> : vector<32x32xf32>
    %81 = tpu.matmul %78, %80, %cst_57 {dimension_numbers = #tpu.dot_dimension_numbers<[1], [0], [0], [1], [0, 0, 1, 1], [], []>} : vector<32x16xbf16>, vector<16x32xbf16>, vector<32x32xf32> -> vector<32x32xf32>
    %82 = arith.addf %73, %81 : vector<32x32xf32>
    %c0_58 = arith.constant 0 : index
    %c0_59 = arith.constant 0 : index
    %83 = vector.load %arg5[%c0_58, %c0_59] : memref<1x32xf32, #tpu.memory_space<vmem>>, vector<1x32xf32>
    %84 = vector.broadcast %83 : vector<1x32xf32> to vector<32x32xf32>
    %85 = arith.addf %82, %84 : vector<32x32xf32>
    %cst_60 = arith.constant 0.000000e+00 : f32
    %86 = vector.broadcast %cst_60 : f32 to vector<32x32xf32>
    %87 = arith.maximumf %85, %86 : vector<32x32xf32>
    %88 = vector.extract_strided_slice %87 {offsets = [0, 0], sizes = [16, 32], strides = [1, 1]} : vector<32x32xf32> to vector<16x32xf32>
    %cst_61 = arith.constant dense<0xFF800000> : vector<32xf32>
    %89 = vector.multi_reduction <maximumf>, %88, %cst_61 [0] : vector<16x32xf32> to vector<32xf32>
    %90 = vector.shape_cast %89 : vector<32xf32> to vector<1x32xf32>
    %91 = vector.extract_strided_slice %87 {offsets = [16, 0], sizes = [16, 32], strides = [1, 1]} : vector<32x32xf32> to vector<16x32xf32>
    %cst_62 = arith.constant dense<0xFF800000> : vector<32xf32>
    %92 = vector.multi_reduction <maximumf>, %91, %cst_62 [0] : vector<16x32xf32> to vector<32xf32>
    %93 = vector.shape_cast %92 : vector<32xf32> to vector<1x32xf32>
    %94 = tpu.concatenate %90, %93 in 0 : vector<1x32xf32>, vector<1x32xf32> -> vector<2x32xf32>
    %95 = arith.truncf %94 : vector<2x32xf32> to vector<2x32xbf16>
    %c0_63 = arith.constant 0 : index
    %c0_64 = arith.constant 0 : index
    %96 = vector.load %arg6[%c0_63, %c0_64] : memref<32x128xbf16, #tpu.memory_space<vmem>>, vector<32x128xbf16>
    %cst_65 = arith.constant dense<0.000000e+00> : vector<2x128xf32>
    %97 = tpu.matmul %95, %96, %cst_65 {dimension_numbers = #tpu.dot_dimension_numbers<[1], [0], [0], [1], [0, 0, 1, 1], [], []>} : vector<2x32xbf16>, vector<32x128xbf16>, vector<2x128xf32> -> vector<2x128xf32>
    %c0_66 = arith.constant 0 : index
    %c0_67 = arith.constant 0 : index
    %98 = vector.load %arg7[%c0_66, %c0_67] : memref<1x128xf32, #tpu.memory_space<vmem>>, vector<1x128xf32>
    %99 = vector.broadcast %98 : vector<1x128xf32> to vector<2x128xf32>
    %100 = arith.addf %97, %99 : vector<2x128xf32>
    %c0_68 = arith.constant 0 : index
    %c0_69 = arith.constant 0 : index
    %c0_70 = arith.constant 0 : index
    %101 = vector.load %arg8[%c0_68, %c0_69, %c0_70] : memref<1x2x128xf32, #tpu.memory_space<vmem>>, vector<1x2x128xf32>
    %102 = vector.shape_cast %101 : vector<1x2x128xf32> to vector<2x128xf32>
    %103 = vector.shape_cast %100 : vector<2x128xf32> to vector<1x2x128xf32>
    tpu.vector_store %arg8[%c0_68, %c0_69, %c0_70], %103 {strides = array<i32>} : memref<1x2x128xf32, #tpu.memory_space<vmem>>, vector<1x2x128xf32>,
    return
  }
  func.func @transform_0(%arg0: i32) -> (i32, i32, i32) {
    %c0_i32 = arith.constant 0 : i32
    %c0_i32_0 = arith.constant 0 : i32
    %c0_i32_1 = arith.constant 0 : i32
    return %arg0, %c0_i32, %c0_i32_0 : i32, i32, i32
  }
  func.func @transform_1(%arg0: i32) -> (i32, i32, i32) {
    %c0_i32 = arith.constant 0 : i32
    %c0_i32_0 = arith.constant 0 : i32
    %c0_i32_1 = arith.constant 0 : i32
    %c0_i32_2 = arith.constant 0 : i32
    return %c0_i32, %c0_i32_0, %c0_i32_1 : i32, i32, i32
  }
  func.func @transform_2(%arg0: i32) -> (i32, i32) {
    %c0_i32 = arith.constant 0 : i32
    %c0_i32_0 = arith.constant 0 : i32
    %c0_i32_1 = arith.constant 0 : i32
    return %c0_i32, %c0_i32_0 : i32, i32
  }
  func.func @transform_3(%arg0: i32) -> (i32, i32, i32) {
    %c0_i32 = arith.constant 0 : i32
    %c0_i32_0 = arith.constant 0 : i32
    %c0_i32_1 = arith.constant 0 : i32
    %c0_i32_2 = arith.constant 0 : i32
    return %c0_i32, %c0_i32_0, %c0_i32_1 : i32, i32, i32
  }
  func.func @transform_4(%arg0: i32) -> (i32, i32) {
    %c0_i32 = arith.constant 0 : i32
    %c0_i32_0 = arith.constant 0 : i32
    %c0_i32_1 = arith.constant 0 : i32
    return %c0_i32, %c0_i32_0 : i32, i32
  }
  func.func @transform_5(%arg0: i32) -> (i32, i32) {
    %c0_i32 = arith.constant 0 : i32
    %c0_i32_0 = arith.constant 0 : i32
    %c0_i32_1 = arith.constant 0 : i32
    return %c0_i32, %c0_i32_0 : i32, i32
  }
  func.func @transform_6(%arg0: i32) -> (i32, i32) {
    %c0_i32 = arith.constant 0 : i32
    %c0_i32_0 = arith.constant 0 : i32
    %c0_i32_1 = arith.constant 0 : i32
    return %c0_i32, %c0_i32_0 : i32, i32
  }
  func.func @transform_7(%arg0: i32) -> (i32, i32, i32) {
    %c0_i32 = arith.constant 0 : i32
    %c0_i32_0 = arith.constant 0 : i32
    %c0_i32_1 = arith.constant 0 : i32
    return %arg0, %c0_i32, %c0_i32_0 : i32, i32, i32
  }
}

</mosaic_0001>

<llo_original>
// kernel: tpu_custom_call.1
$region0: #{tpu_custom_call.1}
  #allocation0 [shape = 'u32[]', space=smem, size = 0x4, offset = 0x4, fixed_abs, tag = 'smem constant byte address 0x4 - core index']
  #allocation1 [shape = 'u32[144,128]{1,0:T(1,128)}', space=vmem, size = 0x12000, scoped, tag = 'internal scratch']
  #allocation2 [shape = 'bf16[48,128]{1,0:T(16,128)(2,1)}', space=vmem, size = 0x3000, scoped, tag = 'scratch operand']
  %s0 = inlined_call_operand.vmem [shape: f32[2,16,8], index: 0, kind: input, shape index: {}]
  %s1 = inlined_call_operand.vmem [shape: bf16[4,8,16], index: 1, kind: input, shape index: {}]
  %s2 = inlined_call_operand.vmem [shape: f32[1,16], index: 2, kind: input, shape index: {}]
  %s3 = inlined_call_operand.vmem [shape: bf16[4,16,32], index: 3, kind: input, shape index: {}]
  %s4 = inlined_call_operand.vmem [shape: f32[1,32], index: 4, kind: input, shape index: {}]
  %s5 = inlined_call_operand.vmem [shape: bf16[32,128], index: 5, kind: input, shape index: {}]
  %s6 = inlined_call_operand.vmem [shape: f32[1,128], index: 6, kind: input, shape index: {}]
  %s7 = inlined_call_operand.hbm [shape: f32[1,2,128], index: 7, kind: output, shape index: {}]
  %s8 = sld [smem:[#allocation0]]
  $region38: #{tpu_custom_call.1} parent=0
    _
  %s10 = ssub.s32 1, %s8
  %s11 = scalar_select 0, %s10, %s8
  $region1: #{tpu_custom_call.1} parent=0
    #allocation3 [shape = 'u8[1024]{0}', space=vmem, size = 0x400, scoped, tag = 'output window, operand 0, single buffered']
    #allocation4 [shape = 's32[1]{0}', space=sflag, size = 0x4, scoped, tag = 'scoped memory for tpu_custom_call.1']
    %12 = vsyncpa [#allocation4], 0
    // Predicated region
    $region2: #{tpu_custom_call.1} parent=1 // pred_check
      _
    $region3: #{tpu_custom_call.1} parent=1 // pred_check_branch
      %14 = sbr.rel (0) target = $region5
    $region4: #{tpu_custom_call.1} parent=1 // pred_region
      _
    $region5: #{tpu_custom_call.1} parent=1 // pred_fallthru
      _
    // Predicated region
    $region6: #{tpu_custom_call.1} parent=1 // pred_check
      _
    $region7: #{tpu_custom_call.1} parent=1 // pred_check_branch
      %16 = sbr.rel (0) target = $region9
    $region8: #{tpu_custom_call.1} parent=1 // pred_region
      _
    $region9: #{tpu_custom_call.1} parent=1 // pred_fallthru
      _
    // Predicated region
    $region10: #{tpu_custom_call.1} parent=1 // pred_check
      _
    $region11: #{tpu_custom_call.1} parent=1 // pred_check_branch
      %18 = sbr.rel (0) target = $region13
    $region12: #{tpu_custom_call.1} parent=1 // pred_region
      _
    $region13: #{tpu_custom_call.1} parent=1 // pred_fallthru
      _
    // Predicated region
    $region14: #{tpu_custom_call.1} parent=1 // pred_check
      _
    $region15: #{tpu_custom_call.1} parent=1 // pred_check_branch
      %20 = sbr.rel (0) target = $region17
    $region16: #{tpu_custom_call.1} parent=1 // pred_region
      _
    $region17: #{tpu_custom_call.1} parent=1 // pred_fallthru
      _
    // Predicated region
    $region18: #{tpu_custom_call.1} parent=1 // pred_check
      _
    $region19: #{tpu_custom_call.1} parent=1 // pred_check_branch
      %22 = sbr.rel (0) target = $region21
    $region20: #{tpu_custom_call.1} parent=1 // pred_region
      _
    $region21: #{tpu_custom_call.1} parent=1 // pred_fallthru
      _
    // Predicated region
    $region22: #{tpu_custom_call.1} parent=1 // pred_check
      _
    $region23: #{tpu_custom_call.1} parent=1 // pred_check_branch
      %24 = sbr.rel (0) target = $region25
    $region24: #{tpu_custom_call.1} parent=1 // pred_region
      _
    $region25: #{tpu_custom_call.1} parent=1 // pred_fallthru
      _
    // Predicated region
    $region26: #{tpu_custom_call.1} parent=1 // pred_check
      _
    $region27: #{tpu_custom_call.1} parent=1 // pred_check_branch
      %26 = sbr.rel (0) target = $region29
    $region28: #{tpu_custom_call.1} parent=1 // pred_region
      _
    $region29: #{tpu_custom_call.1} parent=1 // pred_fallthru
      _
    %v30 = vld [vmem:[%s0] sm:$0xff]
    %v31 = vld [vmem:[%s0 + $0x8] sm:$0xff]
    %v32 = vpack.c.bf16 %v31, %v30
    %vm33 = vcmask 64512
    %34 = vst.msk [vmem:[#allocation2 + $0x8] sm:$0xff] %vm33, %v32
    %s35 = scalar_lea.vmem %s0, 16
    %v36 = vld [vmem:[%s35] sm:$0xff]
    %v37 = vld [vmem:[%s35 + $0x8] sm:$0xff]
    %v38 = vpack.c.bf16 %v37, %v36
    %39 = vst.msk [vmem:[#allocation2 + $0x10] sm:$0xff] %vm33, %v38
    %v40 = vlaneseq
    %v41 = vshrl.u32 %v40, 7
    %v42 = vadd.s32 %v41, 8
    %43 = vset.pattern.permute.xlu0 0
    %44 = vperm.xlu0 %43, %v41
    %v45 = vpop.permute.xlu0 %44
    %46 = vset.pattern.permute.xlu0 0
    %47 = vperm.xlu0 %46, %v42
    %v48 = vpop.permute.xlu0 %47
    %v49 = vld [vmem:[#allocation2 + $0x8] sm:$0xff]
    %v50 = vld [vmem:[#allocation2 + $0x10] sm:$0xff]
    %s51 = scalar_lea.vmem %s1, 12
    %v52 = vld [vmem:[%s51] sm:$0xf]
    %v53 = vld [vmem:[#allocation2] sm:$0xc0]
    %v54 = vld [vmem:[#allocation2 + $0x10] sm:$0x7f]
    %vm55 = vcmp.lt.s32.totalorder %v45, 3
    %vm56 = vcmp.lt.s32.totalorder %v48, 3
    %vm57 = vmpackc.low %vm55, %vm55
    %vm58 = vmpackc.low %vm56, %vm56
    %v59 = vsel %vm57, 65537, 0
    %v60 = vsel %vm58, 65537, 0
    %v61 = vunpack.c.l.b16 %v59
    %v62 = vunpack.c.l.b16 %v60
    %v63 = vpack.c.b16 %v62, %v61
    %vm64 = vsmask.f32 6400
    %v66 = vshrl.u32 %v63, 16
    %v68 = vrot.slane %v66, 1
    %v69 = vshll.u32 %v63, 16
    %v71 = vrot.slane %v69, 2
    %v72 = vor.u32 %v68, %v71
    %v73 = vsel %vm64, %v72, %v72
    %vm74 = vcmp.ne.s16.totalorder %v72, 0
    %vm75 = vcmp.ne.s16.totalorder %v73, 0
    %v76 = vsel %vm74, 0, %v53
    %v77 = vsel %vm75, 0, %v49
    %v78 = vsel %vm74, 0, %v54
    %v79 = vld [vmem:[%s1] sm:$0xf]
    %vm80 = vsmask.f32 1280
    %v82 = vshrl.u32 %v76, 16
    %v84 = vrot.slane %v82, 6
    %v85 = vshll.u32 %v76, 16
    %v87 = vrot.slane %v85, 7
    %v88 = vor.u32 %v84, %v87
    %v90 = vshrl.u32 %v77, 16
    %v92 = vrot.slane %v90, 6
    %v93 = vshll.u32 %v77, 16
    %v95 = vrot.slane %v93, 7
    %v96 = vor.u32 %v92, %v95
    %v97 = vsel %vm80, %v88, %v96
    %v99 = vshrl.u32 %v78, 16
    %v101 = vrot.slane %v99, 6
    %v102 = vshll.u32 %v78, 16
    %v104 = vrot.slane %v102, 7
    %v105 = vor.u32 %v101, %v104
    %v106 = vsel %vm80, %v96, %v105
    %v108 = vsel %vm33, %v97, 0
    %v111 = vsel %vm33, %v106, 0
    %vm113 = vcmask 1043456
    %v115 = vsel %vm113, %v79, 0
    %117 = vmatprep.subr.bf16.mxu0 0
    %118 = vmatpush1.bf16.msra.mxu0 %v115
    %119 = vmatprep.subr.bf16.mxu0 0
    %120 = vmatpush1.bf16.msra.mxu0 0
    %121 = vmatprep.subr.bf16.mxu0 0
    %122 = vmatpush1.bf16.msra.mxu0 0
    %123 = vmatprep.subr.bf16.mxu0 0
    %124 = vmatpush1.bf16.msra.mxu0 0
    %125 = vmatprep.subr.bf16.mxu0 0
    %126 = vmatpush1.bf16.msra.mxu0 0
    %127 = vmatprep.subr.bf16.mxu0 0
    %128 = vmatpush1.bf16.msra.mxu0 0
    %129 = vmatprep.subr.bf16.mxu0 0
    %130 = vmatpush1.bf16.msra.mxu0 0
    %131 = vmatprep.subr.bf16.mxu0 0
    %132 = vmatpush1.bf16.msra.mxu0 0
    %133 = vmatprep.subr.bf16.mxu0 0
    %134 = vmatpush1.bf16.msra.mxu0 0
    %135 = vmatprep.subr.bf16.mxu0 0
    %136 = vmatpush1.bf16.msra.mxu0 0
    %137 = vmatprep.subr.bf16.mxu0 0
    %138 = vmatpush1.bf16.msra.mxu0 0
    %139 = vmatprep.subr.bf16.mxu0 0
    %140 = vmatpush1.bf16.msra.mxu0 0
    %141 = vmatprep.subr.bf16.mxu0 0
    %142 = vmatpush1.bf16.msra.mxu0 0
    %143 = vmatprep.subr.bf16.mxu0 0
    %144 = vmatpush1.bf16.msra.mxu0 0
    %145 = vmatprep.subr.bf16.mxu0 0
    %146 = vmatpush1.bf16.msra.mxu0 0
    %147 = vmatprep.subr.bf16.mxu0 0
    %148 = vmatpush1.bf16.msra.mxu0 0
    %149 = vmatprep.mubr.bf16.mxu0 0
    %150 = vmatmul.mubr.bf16.gmra.mrb[0].mxu0 %v108
    %v151 = vpop.f32.mrb[0].mxu0
    %v152 = vadd.f32 0.0, %v151
    %v153 = vpop.f32.mrb[0].mxu0
    %v154 = vpop.f32.mrb[0].mxu0
    %v155 = vadd.f32 0.0, %v154
    %v156 = vpop.f32.mrb[0].mxu0
    %157 = vmatprep.mubr.bf16.mxu0 0
    %158 = vmatmul.mubr.bf16.gmra.mrb[0].mxu0 %v111
    %v159 = vpop.f32.mrb[0].mxu0
    %v160 = vadd.f32 0.0, %v159
    %v161 = vpop.f32.mrb[0].mxu0
    %v162 = vpop.f32.mrb[0].mxu0
    %v163 = vadd.f32 0.0, %v162
    %v164 = vpop.f32.mrb[0].mxu0
    %165 = vdwg.mxu0
    %v167 = vsel %vm33, %v49, 0
    %v170 = vsel %vm33, %v50, 0
    %v173 = vsel %vm113, %v52, 0
    %175 = vmatprep.subr.bf16.mxu0 0
    %176 = vmatpush1.bf16.msra.mxu0 %v173
    %177 = vmatprep.subr.bf16.mxu0 0
    %178 = vmatpush1.bf16.msra.mxu0 0
    %179 = vmatprep.subr.bf16.mxu0 0
    %180 = vmatpush1.bf16.msra.mxu0 0
    %181 = vmatprep.subr.bf16.mxu0 0
    %182 = vmatpush1.bf16.msra.mxu0 0
    %183 = vmatprep.subr.bf16.mxu0 0
    %184 = vmatpush1.bf16.msra.mxu0 0
    %185 = vmatprep.subr.bf16.mxu0 0
    %186 = vmatpush1.bf16.msra.mxu0 0
    %187 = vmatprep.subr.bf16.mxu0 0
    %188 = vmatpush1.bf16.msra.mxu0 0
    %189 = vmatprep.subr.bf16.mxu0 0
    %190 = vmatpush1.bf16.msra.mxu0 0
    %191 = vmatprep.subr.bf16.mxu0 0
    %192 = vmatpush1.bf16.msra.mxu0 0
    %193 = vmatprep.subr.bf16.mxu0 0
    %194 = vmatpush1.bf16.msra.mxu0 0
    %195 = vmatprep.subr.bf16.mxu0 0
    %196 = vmatpush1.bf16.msra.mxu0 0
    %197 = vmatprep.subr.bf16.mxu0 0
    %198 = vmatpush1.bf16.msra.mxu0 0
    %199 = vmatprep.subr.bf16.mxu0 0
    %200 = vmatpush1.bf16.msra.mxu0 0
    %201 = vmatprep.subr.bf16.mxu0 0
    %202 = vmatpush1.bf16.msra.mxu0 0
    %203 = vmatprep.subr.bf16.mxu0 0
    %204 = vmatpush1.bf16.msra.mxu0 0
    %205 = vmatprep.subr.bf16.mxu0 0
    %206 = vmatpush1.bf16.msra.mxu0 0
    %207 = vmatprep.mubr.bf16.mxu0 0
    %208 = vmatmul.mubr.bf16.gmra.mrb[0].mxu0 %v167
    %v209 = vpop.f32.mrb[0].mxu0
    %v210 = vadd.f32 %v152, %v209
    %v211 = vpop.f32.mrb[0].mxu0
    %v212 = vpop.f32.mrb[0].mxu0
    %v213 = vadd.f32 %v155, %v212
    %v214 = vpop.f32.mrb[0].mxu0
    %215 = vmatprep.mubr.bf16.mxu0 0
    %216 = vmatmul.mubr.bf16.gmra.mrb[0].mxu0 %v170
    %v217 = vpop.f32.mrb[0].mxu0
    %v218 = vadd.f32 %v160, %v217
    %v219 = vpop.f32.mrb[0].mxu0
    %v220 = vpop.f32.mrb[0].mxu0
    %v221 = vadd.f32 %v163, %v220
    %v222 = vpop.f32.mrb[0].mxu0
    %223 = vdwg.mxu0
    %v224 = vld [vmem:[#allocation2] sm:$0x80]
    %vm225 = vcmp.lt.s32.totalorder %v45, 2
    %vm226 = vcmp.lt.s32.totalorder %v48, 2
    %vm227 = vmpackc.low %vm225, %vm225
    %vm228 = vmpackc.low %vm226, %vm226
    %v229 = vsel %vm227, 65537, 0
    %v230 = vsel %vm228, 65537, 0
    %v231 = vunpack.c.l.b16 %v229
    %v232 = vunpack.c.l.b16 %v230
    %v233 = vpack.c.b16 %v232, %v231
    %vm234 = vcmask 1046528
    %v235 = vrot.slane %v233, 1
    %v236 = vsel %vm234, %v235, %v235
    %vm237 = vcmp.ne.s16.totalorder %v235, 0
    %vm238 = vcmp.ne.s16.totalorder %v236, 0
    %v239 = vsel %vm237, 0, %v224
    %v240 = vsel %vm238, 0, %v49
    %v241 = vsel %vm237, 0, %v54
    %s242 = scalar_lea.vmem %s1, 4
    %v243 = vld [vmem:[%s242] sm:$0xf]
    %vm247 = vcmask 1040384
    %v248 = vrot.slane %v239, 7
    %v249 = vrot.slane %v240, 7
    %v250 = vsel %vm247, %v248, %v249
    %v251 = vrot.slane %v241, 7
    %v252 = vsel %vm247, %v249, %v251
    %v254 = vsel %vm33, %v250, 0
    %v257 = vsel %vm33, %v252, 0
    %v260 = vsel %vm113, %v243, 0
    %262 = vmatprep.subr.bf16.mxu0 0
    %263 = vmatpush1.bf16.msra.mxu0 %v260
    %264 = vmatprep.subr.bf16.mxu0 0
    %265 = vmatpush1.bf16.msra.mxu0 0
    %266 = vmatprep.subr.bf16.mxu0 0
    %267 = vmatpush1.bf16.msra.mxu0 0
    %268 = vmatprep.subr.bf16.mxu0 0
    %269 = vmatpush1.bf16.msra.mxu0 0
    %270 = vmatprep.subr.bf16.mxu0 0
    %271 = vmatpush1.bf16.msra.mxu0 0
    %272 = vmatprep.subr.bf16.mxu0 0
    %273 = vmatpush1.bf16.msra.mxu0 0
    %274 = vmatprep.subr.bf16.mxu0 0
    %275 = vmatpush1.bf16.msra.mxu0 0
    %276 = vmatprep.subr.bf16.mxu0 0
    %277 = vmatpush1.bf16.msra.mxu0 0
    %278 = vmatprep.subr.bf16.mxu0 0
    %279 = vmatpush1.bf16.msra.mxu0 0
    %280 = vmatprep.subr.bf16.mxu0 0
    %281 = vmatpush1.bf16.msra.mxu0 0
    %282 = vmatprep.subr.bf16.mxu0 0
    %283 = vmatpush1.bf16.msra.mxu0 0
    %284 = vmatprep.subr.bf16.mxu0 0
    %285 = vmatpush1.bf16.msra.mxu0 0
    %286 = vmatprep.subr.bf16.mxu0 0
    %287 = vmatpush1.bf16.msra.mxu0 0
    %288 = vmatprep.subr.bf16.mxu0 0
    %289 = vmatpush1.bf16.msra.mxu0 0
    %290 = vmatprep.subr.bf16.mxu0 0
    %291 = vmatpush1.bf16.msra.mxu0 0
    %292 = vmatprep.subr.bf16.mxu0 0
    %293 = vmatpush1.bf16.msra.mxu0 0
    %294 = vmatprep.mubr.bf16.mxu0 0
    %295 = vmatmul.mubr.bf16.gmra.mrb[0].mxu0 %v254
    %v296 = vpop.f32.mrb[0].mxu0
    %v297 = vadd.f32 0.0, %v296
    %v298 = vpop.f32.mrb[0].mxu0
    %v299 = vpop.f32.mrb[0].mxu0
    %v300 = vadd.f32 0.0, %v299
    %v301 = vpop.f32.mrb[0].mxu0
    %302 = vmatprep.mubr.bf16.mxu0 0
    %303 = vmatmul.mubr.bf16.gmra.mrb[0].mxu0 %v257
    %v304 = vpop.f32.mrb[0].mxu0
    %v305 = vadd.f32 0.0, %v304
    %v306 = vpop.f32.mrb[0].mxu0
    %v307 = vpop.f32.mrb[0].mxu0
    %v308 = vadd.f32 0.0, %v307
    %v309 = vpop.f32.mrb[0].mxu0
    %310 = vdwg.mxu0
    %v311 = vadd.f32 %v210, %v297
    %v312 = vadd.f32 %v213, %v300
    %v313 = vadd.f32 %v218, %v305
    %v314 = vadd.f32 %v221, %v308
    %vm315 = vcmp.lt.s32.totalorder %v45, 1
    %vm316 = vcmp.lt.s32.totalorder %v48, 1
    %vm317 = vmpackc.low %vm315, %vm315
    %vm318 = vmpackc.low %vm316, %vm316
    %v319 = vsel %vm317, 65537, 0
    %v320 = vsel %vm318, 65537, 0
    %v321 = vunpack.c.l.b16 %v319
    %v322 = vunpack.c.l.b16 %v320
    %v323 = vpack.c.b16 %v322, %v321
    %vm324 = vsmask.f32 7424
    %v326 = vshll.u32 %v323, 16
    %v328 = vrot.slane %v326, 1
    %v329 = vshrl.u32 %v323, 16
    %v331 = vor.u32 %v329, %v328
    %v332 = vsel %vm324, %v331, %v328
    %vm333 = vcmp.ne.s16.totalorder %v328, 0
    %vm334 = vcmp.ne.s16.totalorder %v332, 0
    %vm335 = vcmp.ne.s16.totalorder %v331, 0
    %v336 = vsel %vm333, 0, %v224
    %v337 = vsel %vm334, 0, %v49
    %v338 = vsel %vm335, 0, %v50
    %s339 = scalar_lea.vmem %s1, 8
    %v340 = vld [vmem:[%s339] sm:$0xf]
    %vm341 = vsmask.f32 256
    %v343 = vshrl.u32 %v336, 16
    %v345 = vrot.slane %v343, 7
    %v347 = vshrl.u32 %v337, 16
    %v349 = vrot.slane %v347, 7
    %v350 = vshll.u32 %v337, 16
    %v352 = vor.u32 %v349, %v350
    %v353 = vsel %vm341, %v345, %v352
    %v355 = vshrl.u32 %v338, 16
    %v357 = vrot.slane %v355, 7
    %v358 = vshll.u32 %v338, 16
    %v360 = vor.u32 %v357, %v358
    %v361 = vsel %vm341, %v349, %v360
    %v363 = vsel %vm33, %v353, 0
    %v366 = vsel %vm33, %v361, 0
    %v369 = vsel %vm113, %v340, 0
    %371 = vmatprep.subr.bf16.mxu0 0
    %372 = vmatpush1.bf16.msra.mxu0 %v369
    %373 = vmatprep.subr.bf16.mxu0 0
    %374 = vmatpush1.bf16.msra.mxu0 0
    %375 = vmatprep.subr.bf16.mxu0 0
    %376 = vmatpush1.bf16.msra.mxu0 0
    %377 = vmatprep.subr.bf16.mxu0 0
    %378 = vmatpush1.bf16.msra.mxu0 0
    %379 = vmatprep.subr.bf16.mxu0 0
    %380 = vmatpush1.bf16.msra.mxu0 0
    %381 = vmatprep.subr.bf16.mxu0 0
    %382 = vmatpush1.bf16.msra.mxu0 0
    %383 = vmatprep.subr.bf16.mxu0 0
    %384 = vmatpush1.bf16.msra.mxu0 0
    %385 = vmatprep.subr.bf16.mxu0 0
    %386 = vmatpush1.bf16.msra.mxu0 0
    %387 = vmatprep.subr.bf16.mxu0 0
    %388 = vmatpush1.bf16.msra.mxu0 0
    %389 = vmatprep.subr.bf16.mxu0 0
    %390 = vmatpush1.bf16.msra.mxu0 0
    %391 = vmatprep.subr.bf16.mxu0 0
    %392 = vmatpush1.bf16.msra.mxu0 0
    %393 = vmatprep.subr.bf16.mxu0 0
    %394 = vmatpush1.bf16.msra.mxu0 0
    %395 = vmatprep.subr.bf16.mxu0 0
    %396 = vmatpush1.bf16.msra.mxu0 0
    %397 = vmatprep.subr.bf16.mxu0 0
    %398 = vmatpush1.bf16.msra.mxu0 0
    %399 = vmatprep.subr.bf16.mxu0 0
    %400 = vmatpush1.bf16.msra.mxu0 0
    %401 = vmatprep.subr.bf16.mxu0 0
    %402 = vmatpush1.bf16.msra.mxu0 0
    %403 = vmatprep.mubr.bf16.mxu0 0
    %404 = vmatmul.mubr.bf16.gmra.mrb[0].mxu0 %v363
    %v405 = vpop.f32.mrb[0].mxu0
    %v406 = vadd.f32 0.0, %v405
    %v407 = vpop.f32.mrb[0].mxu0
    %v408 = vpop.f32.mrb[0].mxu0
    %v409 = vadd.f32 0.0, %v408
    %v410 = vpop.f32.mrb[0].mxu0
    %411 = vmatprep.mubr.bf16.mxu0 0
    %412 = vmatmul.mubr.bf16.gmra.mrb[0].mxu0 %v366
    %v413 = vpop.f32.mrb[0].mxu0
    %v414 = vadd.f32 0.0, %v413
    %v415 = vpop.f32.mrb[0].mxu0
    %v416 = vpop.f32.mrb[0].mxu0
    %v417 = vadd.f32 0.0, %v416
    %v418 = vpop.f32.mrb[0].mxu0
    %419 = vdwg.mxu0
    %v420 = vadd.f32 %v311, %v406
    %v421 = vadd.f32 %v312, %v409
    %v422 = vadd.f32 %v313, %v414
    %v423 = vadd.f32 %v314, %v417
    %v424 = vld [vmem:[%s2] sm:$0x1]
    %v426 = vlaneseq
    %v427 = vshrl.u32 %v426, 7
    %v428 = vsub.s32 0, %v427
    %v429 = vrot.slane %v424, %v428
    %v431 = vadd.f32 %v420, %v429
    %v432 = vadd.f32 %v421, %v429
    %v433 = vadd.f32 %v422, %v429
    %v434 = vadd.f32 %v423, %v429
    %v435 = vmax.f32 %v431, 0.0
    %v436 = vmax.f32 %v432, 0.0
    %v437 = vmax.f32 %v433, 0.0
    %v438 = vmax.f32 %v434, 0.0
    %v439 = vpack.c.bf16 %v436, %v435
    %v440 = vpack.c.bf16 %v438, %v437
    %vm441 = vcmask 130048
    %442 = vst.msk [vmem:[#allocation2 + $0x8] sm:$0xff] %vm441, %v439
    %443 = vst.msk [vmem:[#allocation2 + $0x10] sm:$0xff] %vm441, %v440
    %v444 = vld [vmem:[#allocation2 + $0x8] sm:$0xff]
    %v445 = vld [vmem:[#allocation2 + $0x10] sm:$0xff]
    %s446 = scalar_lea.vmem %s3, 24
    %v447 = vld [vmem:[%s446] sm:$0xf]
    %v448 = vld [vmem:[%s446 + $0x4] sm:$0xf]
    %v449 = vld [vmem:[#allocation2] sm:$0xe0]
    %v450 = vld [vmem:[#allocation2 + $0x10] sm:$0x1f]
    %vm451 = vcmp.lt.s32.totalorder %v45, 6
    %vm452 = vcmp.lt.s32.totalorder %v48, 6
    %vm453 = vmpackc.low %vm451, %vm451
    %vm454 = vmpackc.low %vm452, %vm452
    %v455 = vsel %vm453, 65537, 0
    %v456 = vsel %vm454, 65537, 0
    %v457 = vunpack.c.l.b16 %v455
    %v458 = vunpack.c.l.b16 %v456
    %v459 = vpack.c.b16 %v458, %v457
    %vm460 = vcmask 1044480
    %v461 = vrot.slane %v459, 3
    %v462 = vsel %vm460, %v461, %v461
    %vm463 = vcmp.ne.s16.totalorder %v461, 0
    %vm464 = vcmp.ne.s16.totalorder %v462, 0
    %v465 = vsel %vm463, 0, %v449
    %v466 = vsel %vm464, 0, %v444
    %v467 = vsel %vm463, 0, %v450
    %v468 = vld [vmem:[%s3] sm:$0xf]
    %v469 = vld [vmem:[%s3 + $0x4] sm:$0xf]
    %vm473 = vcmask 1042432
    %v474 = vrot.slane %v465, 5
    %v475 = vrot.slane %v466, 5
    %v476 = vsel %vm473, %v474, %v475
    %v477 = vrot.slane %v467, 5
    %v478 = vsel %vm473, %v475, %v477
    %v481 = vunpack.c.l.b16 %v468
    %v482 = vunpack.c.l.b16 %v469
    %v483 = vpack.c.b16 %v482, %v481
    %v486 = vsel %vm441, %v476, 0
    %v489 = vsel %vm441, %v478, 0
    %491 = vmatprep.subr.bf16.mxu0 0
    %492 = vmatpush1.bf16.msra.mxu0 %v483
    %493 = vmatprep.subr.bf16.mxu0 0
    %494 = vmatpush1.bf16.msra.mxu0 0
    %495 = vmatprep.subr.bf16.mxu0 0
    %496 = vmatpush1.bf16.msra.mxu0 0
    %497 = vmatprep.subr.bf16.mxu0 0
    %498 = vmatpush1.bf16.msra.mxu0 0
    %499 = vmatprep.subr.bf16.mxu0 0
    %500 = vmatpush1.bf16.msra.mxu0 0
    %501 = vmatprep.subr.bf16.mxu0 0
    %502 = vmatpush1.bf16.msra.mxu0 0
    %503 = vmatprep.subr.bf16.mxu0 0
    %504 = vmatpush1.bf16.msra.mxu0 0
    %505 = vmatprep.subr.bf16.mxu0 0
    %506 = vmatpush1.bf16.msra.mxu0 0
    %507 = vmatprep.subr.bf16.mxu0 0
    %508 = vmatpush1.bf16.msra.mxu0 0
    %509 = vmatprep.subr.bf16.mxu0 0
    %510 = vmatpush1.bf16.msra.mxu0 0
    %511 = vmatprep.subr.bf16.mxu0 0
    %512 = vmatpush1.bf16.msra.mxu0 0
    %513 = vmatprep.subr.bf16.mxu0 0
    %514 = vmatpush1.bf16.msra.mxu0 0
    %515 = vmatprep.subr.bf16.mxu0 0
    %516 = vmatpush1.bf16.msra.mxu0 0
    %517 = vmatprep.subr.bf16.mxu0 0
    %518 = vmatpush1.bf16.msra.mxu0 0
    %519 = vmatprep.subr.bf16.mxu0 0
    %520 = vmatpush1.bf16.msra.mxu0 0
    %521 = vmatprep.subr.bf16.mxu0 0
    %522 = vmatpush1.bf16.msra.mxu0 0
    %523 = vmatprep.mubr.bf16.mxu0 0
    %524 = vmatmul.mubr.bf16.gmra.mrb[0].mxu0 %v486
    %v525 = vpop.f32.mrb[0].mxu0
    %v526 = vadd.f32 0.0, %v525
    %v527 = vpop.f32.mrb[0].mxu0
    %v528 = vpop.f32.mrb[0].mxu0
    %v529 = vadd.f32 0.0, %v528
    %v530 = vpop.f32.mrb[0].mxu0
    %531 = vmatprep.mubr.bf16.mxu0 0
    %532 = vmatmul.mubr.bf16.gmra.mrb[0].mxu0 %v489
    %v533 = vpop.f32.mrb[0].mxu0
    %v534 = vadd.f32 0.0, %v533
    %v535 = vpop.f32.mrb[0].mxu0
    %v536 = vpop.f32.mrb[0].mxu0
    %v537 = vadd.f32 0.0, %v536
    %v538 = vpop.f32.mrb[0].mxu0
    %539 = vdwg.mxu0
    %v542 = vunpack.c.l.b16 %v447
    %v543 = vunpack.c.l.b16 %v448
    %v544 = vpack.c.b16 %v543, %v542
    %v547 = vsel %vm441, %v444, 0
    %v550 = vsel %vm441, %v445, 0
    %552 = vmatprep.subr.bf16.mxu0 0
    %553 = vmatpush1.bf16.msra.mxu0 %v544
    %554 = vmatprep.subr.bf16.mxu0 0
    %555 = vmatpush1.bf16.msra.mxu0 0
    %556 = vmatprep.subr.bf16.mxu0 0
    %557 = vmatpush1.bf16.msra.mxu0 0
    %558 = vmatprep.subr.bf16.mxu0 0
    %559 = vmatpush1.bf16.msra.mxu0 0
    %560 = vmatprep.subr.bf16.mxu0 0
    %561 = vmatpush1.bf16.msra.mxu0 0
    %562 = vmatprep.subr.bf16.mxu0 0
    %563 = vmatpush1.bf16.msra.mxu0 0
    %564 = vmatprep.subr.bf16.mxu0 0
    %565 = vmatpush1.bf16.msra.mxu0 0
    %566 = vmatprep.subr.bf16.mxu0 0
    %567 = vmatpush1.bf16.msra.mxu0 0
    %568 = vmatprep.subr.bf16.mxu0 0
    %569 = vmatpush1.bf16.msra.mxu0 0
    %570 = vmatprep.subr.bf16.mxu0 0
    %571 = vmatpush1.bf16.msra.mxu0 0
    %572 = vmatprep.subr.bf16.mxu0 0
    %573 = vmatpush1.bf16.msra.mxu0 0
    %574 = vmatprep.subr.bf16.mxu0 0
    %575 = vmatpush1.bf16.msra.mxu0 0
    %576 = vmatprep.subr.bf16.mxu0 0
    %577 = vmatpush1.bf16.msra.mxu0 0
    %578 = vmatprep.subr.bf16.mxu0 0
    %579 = vmatpush1.bf16.msra.mxu0 0
    %580 = vmatprep.subr.bf16.mxu0 0
    %581 = vmatpush1.bf16.msra.mxu0 0
    %582 = vmatprep.subr.bf16.mxu0 0
    %583 = vmatpush1.bf16.msra.mxu0 0
    %584 = vmatprep.mubr.bf16.mxu0 0
    %585 = vmatmul.mubr.bf16.gmra.mrb[0].mxu0 %v547
    %v586 = vpop.f32.mrb[0].mxu0
    %v587 = vadd.f32 %v526, %v586
    %v588 = vpop.f32.mrb[0].mxu0
    %v589 = vpop.f32.mrb[0].mxu0
    %v590 = vadd.f32 %v529, %v589
    %v591 = vpop.f32.mrb[0].mxu0
    %592 = vmatprep.mubr.bf16.mxu0 0
    %593 = vmatmul.mubr.bf16.gmra.mrb[0].mxu0 %v550
    %v594 = vpop.f32.mrb[0].mxu0
    %v595 = vadd.f32 %v534, %v594
    %v596 = vpop.f32.mrb[0].mxu0
    %v597 = vpop.f32.mrb[0].mxu0
    %v598 = vadd.f32 %v537, %v597
    %v599 = vpop.f32.mrb[0].mxu0
    %600 = vdwg.mxu0
    %v601 = vld [vmem:[#allocation2] sm:$0xc0]
    %v602 = vld [vmem:[#allocation2 + $0x10] sm:$0x3f]
    %vm603 = vcmp.lt.s32.totalorder %v45, 4
    %vm604 = vcmp.lt.s32.totalorder %v48, 4
    %vm605 = vmpackc.low %vm603, %vm603
    %vm606 = vmpackc.low %vm604, %vm604
    %v607 = vsel %vm605, 65537, 0
    %v608 = vsel %vm606, 65537, 0
    %v609 = vunpack.c.l.b16 %v607
    %v610 = vunpack.c.l.b16 %v608
    %v611 = vpack.c.b16 %v610, %v609
    %vm612 = vcmask 1045504
    %v613 = vrot.slane %v611, 2
    %v614 = vsel %vm612, %v613, %v613
    %vm615 = vcmp.ne.s16.totalorder %v613, 0
    %vm616 = vcmp.ne.s16.totalorder %v614, 0
    %v617 = vsel %vm615, 0, %v601
    %v618 = vsel %vm616, 0, %v444
    %v619 = vsel %vm615, 0, %v602
    %s620 = scalar_lea.vmem %s3, 8
    %v621 = vld [vmem:[%s620] sm:$0xf]
    %v622 = vld [vmem:[%s620 + $0x4] sm:$0xf]
    %vm626 = vcmask 1041408
    %v627 = vrot.slane %v617, 6
    %v628 = vrot.slane %v618, 6
    %v629 = vsel %vm626, %v627, %v628
    %v630 = vrot.slane %v619, 6
    %v631 = vsel %vm626, %v628, %v630
    %v634 = vunpack.c.l.b16 %v621
    %v635 = vunpack.c.l.b16 %v622
    %v636 = vpack.c.b16 %v635, %v634
    %v639 = vsel %vm441, %v629, 0
    %v642 = vsel %vm441, %v631, 0
    %644 = vmatprep.subr.bf16.mxu0 0
    %645 = vmatpush1.bf16.msra.mxu0 %v636
    %646 = vmatprep.subr.bf16.mxu0 0
    %647 = vmatpush1.bf16.msra.mxu0 0
    %648 = vmatprep.subr.bf16.mxu0 0
    %649 = vmatpush1.bf16.msra.mxu0 0
    %650 = vmatprep.subr.bf16.mxu0 0
    %651 = vmatpush1.bf16.msra.mxu0 0
    %652 = vmatprep.subr.bf16.mxu0 0
    %653 = vmatpush1.bf16.msra.mxu0 0
    %654 = vmatprep.subr.bf16.mxu0 0
    %655 = vmatpush1.bf16.msra.mxu0 0
    %656 = vmatprep.subr.bf16.mxu0 0
    %657 = vmatpush1.bf16.msra.mxu0 0
    %658 = vmatprep.subr.bf16.mxu0 0
    %659 = vmatpush1.bf16.msra.mxu0 0
    %660 = vmatprep.subr.bf16.mxu0 0
    %661 = vmatpush1.bf16.msra.mxu0 0
    %662 = vmatprep.subr.bf16.mxu0 0
    %663 = vmatpush1.bf16.msra.mxu0 0
    %664 = vmatprep.subr.bf16.mxu0 0
    %665 = vmatpush1.bf16.msra.mxu0 0
    %666 = vmatprep.subr.bf16.mxu0 0
    %667 = vmatpush1.bf16.msra.mxu0 0
    %668 = vmatprep.subr.bf16.mxu0 0
    %669 = vmatpush1.bf16.msra.mxu0 0
    %670 = vmatprep.subr.bf16.mxu0 0
    %671 = vmatpush1.bf16.msra.mxu0 0
    %672 = vmatprep.subr.bf16.mxu0 0
    %673 = vmatpush1.bf16.msra.mxu0 0
    %674 = vmatprep.subr.bf16.mxu0 0
    %675 = vmatpush1.bf16.msra.mxu0 0
    %676 = vmatprep.mubr.bf16.mxu0 0
    %677 = vmatmul.mubr.bf16.gmra.mrb[0].mxu0 %v639
    %v678 = vpop.f32.mrb[0].mxu0
    %v679 = vadd.f32 0.0, %v678
    %v680 = vpop.f32.mrb[0].mxu0
    %v681 = vpop.f32.mrb[0].mxu0
    %v682 = vadd.f32 0.0, %v681
    %v683 = vpop.f32.mrb[0].mxu0
    %684 = vmatprep.mubr.bf16.mxu0 0
    %685 = vmatmul.mubr.bf16.gmra.mrb[0].mxu0 %v642
    %v686 = vpop.f32.mrb[0].mxu0
    %v687 = vadd.f32 0.0, %v686
    %v688 = vpop.f32.mrb[0].mxu0
    %v689 = vpop.f32.mrb[0].mxu0
    %v690 = vadd.f32 0.0, %v689
    %v691 = vpop.f32.mrb[0].mxu0
    %692 = vdwg.mxu0
    %v693 = vadd.f32 %v587, %v679
    %v694 = vadd.f32 %v590, %v682
    %v695 = vadd.f32 %v595, %v687
    %v696 = vadd.f32 %v598, %v690
    %v697 = vld [vmem:[#allocation2] sm:$0x80]
    %v698 = vld [vmem:[#allocation2 + $0x10] sm:$0x7f]
    %v699 = vsel %vm237, 0, %v697
    %v700 = vsel %vm238, 0, %v444
    %v701 = vsel %vm237, 0, %v698
    %s702 = scalar_lea.vmem %s3, 16
    %v703 = vld [vmem:[%s702] sm:$0xf]
    %v704 = vld [vmem:[%s702 + $0x4] sm:$0xf]
    %v708 = vrot.slane %v699, 7
    %v709 = vrot.slane %v700, 7
    %v710 = vsel %vm247, %v708, %v709
    %v711 = vrot.slane %v701, 7
    %v712 = vsel %vm247, %v709, %v711
    %v715 = vunpack.c.l.b16 %v703
    %v716 = vunpack.c.l.b16 %v704
    %v717 = vpack.c.b16 %v716, %v715
    %v720 = vsel %vm441, %v710, 0
    %v723 = vsel %vm441, %v712, 0
    %725 = vmatprep.subr.bf16.mxu0 0
    %726 = vmatpush1.bf16.msra.mxu0 %v717
    %727 = vmatprep.subr.bf16.mxu0 0
    %728 = vmatpush1.bf16.msra.mxu0 0
    %729 = vmatprep.subr.bf16.mxu0 0
    %730 = vmatpush1.bf16.msra.mxu0 0
    %731 = vmatprep.subr.bf16.mxu0 0
    %732 = vmatpush1.bf16.msra.mxu0 0
    %733 = vmatprep.subr.bf16.mxu0 0
    %734 = vmatpush1.bf16.msra.mxu0 0
    %735 = vmatprep.subr.bf16.mxu0 0
    %736 = vmatpush1.bf16.msra.mxu0 0
    %737 = vmatprep.subr.bf16.mxu0 0
    %738 = vmatpush1.bf16.msra.mxu0 0
    %739 = vmatprep.subr.bf16.mxu0 0
    %740 = vmatpush1.bf16.msra.mxu0 0
    %741 = vmatprep.subr.bf16.mxu0 0
    %742 = vmatpush1.bf16.msra.mxu0 0
    %743 = vmatprep.subr.bf16.mxu0 0
    %744 = vmatpush1.bf16.msra.mxu0 0
    %745 = vmatprep.subr.bf16.mxu0 0
    %746 = vmatpush1.bf16.msra.mxu0 0
    %747 = vmatprep.subr.bf16.mxu0 0
    %748 = vmatpush1.bf16.msra.mxu0 0
    %749 = vmatprep.subr.bf16.mxu0 0
    %750 = vmatpush1.bf16.msra.mxu0 0
    %751 = vmatprep.subr.bf16.mxu0 0
    %752 = vmatpush1.bf16.msra.mxu0 0
    %753 = vmatprep.subr.bf16.mxu0 0
    %754 = vmatpush1.bf16.msra.mxu0 0
    %755 = vmatprep.subr.bf16.mxu0 0
    %756 = vmatpush1.bf16.msra.mxu0 0
    %757 = vmatprep.mubr.bf16.mxu0 0
    %758 = vmatmul.mubr.bf16.gmra.mrb[0].mxu0 %v720
    %v759 = vpop.f32.mrb[0].mxu0
    %v760 = vadd.f32 0.0, %v759
    %v761 = vpop.f32.mrb[0].mxu0
    %v762 = vpop.f32.mrb[0].mxu0
    %v763 = vadd.f32 0.0, %v762
    %v764 = vpop.f32.mrb[0].mxu0
    %765 = vmatprep.mubr.bf16.mxu0 0
    %766 = vmatmul.mubr.bf16.gmra.mrb[0].mxu0 %v723
    %v767 = vpop.f32.mrb[0].mxu0
    %v768 = vadd.f32 0.0, %v767
    %v769 = vpop.f32.mrb[0].mxu0
    %v770 = vpop.f32.mrb[0].mxu0
    %v771 = vadd.f32 0.0, %v770
    %v772 = vpop.f32.mrb[0].mxu0
    %773 = vdwg.mxu0
    %v774 = vadd.f32 %v693, %v760
    %v775 = vadd.f32 %v694, %v763
    %v776 = vadd.f32 %v695, %v768
    %v777 = vadd.f32 %v696, %v771
    %v778 = vld [vmem:[%s4] sm:$0x1]
    %v780 = vlaneseq
    %v781 = vshrl.u32 %v780, 7
    %v782 = vsub.s32 0, %v781
    %v783 = vrot.slane %v778, %v782
    %v785 = vadd.f32 %v774, %v783
    %v786 = vadd.f32 %v775, %v783
    %v787 = vadd.f32 %v776, %v783
    %v788 = vadd.f32 %v777, %v783
    %v789 = vmax.f32 %v785, 0.0
    %v790 = vmax.f32 %v786, 0.0
    %v791 = vmax.f32 %v787, 0.0
    %v792 = vmax.f32 %v788, 0.0
    %vm793 = vcmask 261120
    %v794 = vsel %vm793, %v789, -inf
    %v795 = vsel %vm793, %v790, -inf
    %v796 = vmax.f32 %v794, %v795
    %v797 = vrot.slane %v796, 4
    %v798 = vmax.f32 %v796, %v797
    %v799 = vrot.slane %v798, 2
    %v800 = vmax.f32 %v798, %v799
    %v801 = vrot.slane %v800, 1
    %v802 = vmax.f32 %v800, %v801
    %v803 = vsel %vm793, %v791, -inf
    %v804 = vsel %vm793, %v792, -inf
    %v805 = vmax.f32 %v803, %v804
    %v806 = vrot.slane %v805, 4
    %v807 = vmax.f32 %v805, %v806
    %v808 = vrot.slane %v807, 2
    %v809 = vmax.f32 %v807, %v808
    %v810 = vrot.slane %v809, 1
    %v811 = vmax.f32 %v809, %v810
    %vm812 = vcmask 1040384
    %v813 = vsel %vm812, %v802, %v811
    %v814 = vpack.c.bf16 %v813, %v813
    %v815 = vld [vmem:[%s5] sm:$0xf]
    %v816 = vld [vmem:[%s5 + $0x4] sm:$0xf]
    %v817 = vld [vmem:[%s5 + $0x8] sm:$0xf]
    %v818 = vld [vmem:[%s5 + $0xc] sm:$0xf]
    %v819 = vld [vmem:[%s6] sm:$0x1]
    %v821 = vlaneseq
    %v822 = vshrl.u32 %v821, 7
    %v823 = vsub.s32 0, %v822
    %v824 = vrot.slane %v819, %v823
    %v830 = vunpack.c.l.b16 %v815
    %v831 = vunpack.c.l.b16 %v816
    %v832 = vunpack.c.l.b16 %v817
    %v833 = vunpack.c.l.b16 %v818
    %v834 = vpack.c.b16 %v831, %v830
    %v835 = vpack.c.b16 %v833, %v832
    %v839 = vsel %vm793, %v814, 0
    %841 = vmatprep.subr.bf16.mxu0 0
    %842 = vmatpush1.bf16.msra.mxu0 %v834
    %843 = vmatprep.subr.bf16.mxu0 0
    %844 = vmatpush1.bf16.msra.mxu0 %v835
    %845 = vmatprep.subr.bf16.mxu0 0
    %846 = vmatpush1.bf16.msra.mxu0 0
    %847 = vmatprep.subr.bf16.mxu0 0
    %848 = vmatpush1.bf16.msra.mxu0 0
    %849 = vmatprep.subr.bf16.mxu0 0
    %850 = vmatpush1.bf16.msra.mxu0 0
    %851 = vmatprep.subr.bf16.mxu0 0
    %852 = vmatpush1.bf16.msra.mxu0 0
    %853 = vmatprep.subr.bf16.mxu0 0
    %854 = vmatpush1.bf16.msra.mxu0 0
    %855 = vmatprep.subr.bf16.mxu0 0
    %856 = vmatpush1.bf16.msra.mxu0 0
    %857 = vmatprep.subr.bf16.mxu0 0
    %858 = vmatpush1.bf16.msra.mxu0 0
    %859 = vmatprep.subr.bf16.mxu0 0
    %860 = vmatpush1.bf16.msra.mxu0 0
    %861 = vmatprep.subr.bf16.mxu0 0
    %862 = vmatpush1.bf16.msra.mxu0 0
    %863 = vmatprep.subr.bf16.mxu0 0
    %864 = vmatpush1.bf16.msra.mxu0 0
    %865 = vmatprep.subr.bf16.mxu0 0
    %866 = vmatpush1.bf16.msra.mxu0 0
    %867 = vmatprep.subr.bf16.mxu0 0
    %868 = vmatpush1.bf16.msra.mxu0 0
    %869 = vmatprep.subr.bf16.mxu0 0
    %870 = vmatpush1.bf16.msra.mxu0 0
    %871 = vmatprep.subr.bf16.mxu0 0
    %872 = vmatpush1.bf16.msra.mxu0 0
    %873 = vmatprep.mubr.bf16.mxu0 0
    %874 = vmatmul.mubr.bf16.gmra.mrb[0].mxu0 %v839
    %v875 = vpop.f32.mrb[0].mxu0
    %v876 = vadd.f32 %v824, %v875
    %v877 = vpop.f32.mrb[0].mxu0
    %v878 = vpop.f32.mrb[0].mxu0
    %v879 = vpop.f32.mrb[0].mxu0
    %880 = vdwg.mxu0
    %881 = vst [vmem:[#allocation3] sm:$0x3] %v876
    // Predicated region
    $region30: #{tpu_custom_call.1} parent=1 // pred_check
      _
    $region31: #{tpu_custom_call.1} parent=1 // pred_check_branch
      %883 = sbr.rel (0) target = $region33
    $region32: #{tpu_custom_call.1} parent=1 // pred_region
      %s885 = ssub.s32 32, 32
      %886 = vsyncadd [#allocation4], %s885
      %s888 = sshll.u32 [#allocation3], 4
      %s889 = int_to_ptr.vmem [resolvable:$true] %s888
      %891 = dma.vmem_to_hbm [thread:$0]  %s889, 32, %s7, [#allocation4]
    $region33: #{tpu_custom_call.1} parent=1 // pred_fallthru
      _
    // Predicated region
    $region34: #{tpu_custom_call.1} parent=1 // pred_check
      _
    $region35: #{tpu_custom_call.1} parent=1 // pred_check_branch
      %893 = sbr.rel (0) target = $region37
    $region36: #{tpu_custom_call.1} parent=1 // pred_region
      %894 = dma.done [#allocation4], 32
    $region37: #{tpu_custom_call.1} parent=1 // pred_fallthru
      _
    %895 = vsyncpa [#allocation4], 1

</llo_original>
